<compile_context>
chip_gen: v7x
topology: tpu7x:2x2x1
jax: 0.10.0
libtpu: 0.0.40
codegen_flags: <defaults>
</compile_context>

<pallas_src>
import functools

import jax
import jax.numpy as jnp
import numpy as np
from jax import lax
from jax.experimental import pallas as pl
from jax.experimental.pallas import tpu as pltpu


def _ln_kernel(x_ref, ab_ref, o_ref, *, eps):
    # x_ref block: (Bb, N, S); normalize over axis 1 (the `dim` axis).
    x = x_ref[...].astype(jnp.float32)
    n = x.shape[1]
    inv_n = 1.0 / n

    # Two independent cross-sublane reductions (can be interleaved on the XLU),
    # instead of mean -> (x - mean)**2 -> mean serialization.
    s1 = jnp.sum(x, axis=1, keepdims=True)             # (Bb, 1, S)
    s2 = jnp.sum(x * x, axis=1, keepdims=True)         # (Bb, 1, S)
    mean = s1 * inv_n
    var = jnp.maximum(s2 * inv_n - mean * mean, 0.0)   # clamp: one-pass stability

    inv_std = lax.rsqrt(var + eps)                     # EUP, not a VPU divide

    alpha = ab_ref[:, 0:1]                             # (N, 1) -> broadcasts (1, N, 1)
    beta = ab_ref[:, 1:2]
    y = (x - mean) * inv_std * alpha + beta
    o_ref[...] = y.astype(o_ref.dtype)


def ln_forward(x, alpha, beta, *, eps=1e-5, max_block_bytes=2 << 20):
    """LN over axis 1 of x:(B, dim, seq) with alpha/beta:(1, dim, 1)."""
    B, N, S = x.shape

    # Pack the two tiny affine params into one (N, 2) tensor.
    ab = jnp.concatenate(
        [jnp.reshape(alpha, (N, 1)), jnp.reshape(beta, (N, 1))], axis=1
    ).astype(jnp.float32)

    # Fold as much batch as fits comfortably into each block: the whole batch in
    # one grid step when small, ~max_block_bytes chunks when B grows large.
    bytes_per_sample = N * S * x.dtype.itemsize
    bb = max(1, min(B, max_block_bytes // max(bytes_per_sample, 1)))
    grid = (pl.cdiv(B, bb),)

    kernel = functools.partial(_ln_kernel, eps=eps)
    return pl.pallas_call(
        kernel,
        out_shape=jax.ShapeDtypeStruct((B, N, S), x.dtype),
        grid_spec=pltpu.PrefetchScalarGridSpec(
            num_scalar_prefetch=0,
            grid=grid,
            in_specs=[
                pl.BlockSpec((bb, N, S), lambda b: (b, 0, 0)),   # x batch chunk
                pl.BlockSpec((N, 2), lambda b: (0, 0)),          # packed alpha/beta
            ],
            out_specs=pl.BlockSpec((bb, N, S), lambda b: (b, 0, 0)),
        ),
        compiler_params=pltpu.CompilerParams(
            dimension_semantics=("parallel",)),
    )(x, ab)


def reference_ln(x, alpha, beta, eps=1e-5):
    mean = x.mean(axis=1, keepdims=True)
    var = ((x - mean) ** 2).mean(axis=1, keepdims=True)
    y = (x - mean) / jnp.sqrt(var + eps)
    return y * alpha + beta


if __name__ == "__main__":
    # Small shapes consistent with the hypergraph model: dim = node_n * 3.
    node_n = 10
    dim = node_n * 3          # 30 -- the LN(dim) / axis-1 normalization axis
    seq = 16
    batch = 2

    key = jax.random.PRNGKey(0)
    kx, ka, kb = jax.random.split(key, 3)
    x = jax.random.normal(kx, (batch, dim, seq), jnp.float32)
    # Random affine params so the scale/shift path is actually exercised
    # (init values are ones/zeros in the module).
    alpha = 1.0 + 0.1 * jax.random.normal(ka, (1, dim, 1), jnp.float32)
    beta = 0.1 * jax.random.normal(kb, (1, dim, 1), jnp.float32)

    out = jax.block_until_ready(ln_forward(x, alpha, beta))
    ref = jax.block_until_ready(reference_ln(x, alpha, beta))

    if not np.allclose(np.asarray(out), np.asarray(ref), rtol=1e-4, atol=1e-4):
        raise AssertionError("Pallas LN output does not match JAX reference")

    print("KERNEL_OK")
</pallas_src>

<mosaic_0001>
module attributes {stable_mosaic.version = 11 : i64} {
  func.func @_ln_kernel(%arg0: i32, %arg1: memref<2x30x16xf32, #tpu.memory_space<vmem>>, %arg2: memref<30x2xf32, #tpu.memory_space<vmem>>, %arg3: memref<2x30x16xf32, #tpu.memory_space<vmem>>) attributes {dimension_semantics = [#tpu.dimension_semantics<parallel>], iteration_bounds = array<i64: 1>, scalar_prefetch = 0 : i64, scratch_operands = 0 : i64, tpu.core_type = #tpu.core_type<tc>, window_params = [{transform_indices = @transform_0, window_bounds = array<i64: 2, 30, 16>}, {pipeline_mode = #tpu.pipeline_mode<synchronous>, transform_indices = @transform_1, window_bounds = array<i64: 30, 2>}, {transform_indices = @transform_2, window_bounds = array<i64: 2, 30, 16>}]} {
    %c0 = arith.constant 0 : index
    %c0_0 = arith.constant 0 : index
    %c0_1 = arith.constant 0 : index
    %0 = vector.load %arg1[%c0, %c0_0, %c0_1] : memref<2x30x16xf32, #tpu.memory_space<vmem>>, vector<2x30x16xf32>
    %cst = arith.constant dense<0.000000e+00> : vector<2x16xf32>
    %1 = vector.multi_reduction <add>, %0, %cst [1] : vector<2x30x16xf32> to vector<2x16xf32>
    %2 = vector.shape_cast %1 : vector<2x16xf32> to vector<2x1x16xf32>
    %3 = arith.mulf %0, %0 : vector<2x30x16xf32>
    %cst_2 = arith.constant dense<0.000000e+00> : vector<2x16xf32>
    %4 = vector.multi_reduction <add>, %3, %cst_2 [1] : vector<2x30x16xf32> to vector<2x16xf32>
    %5 = vector.shape_cast %4 : vector<2x16xf32> to vector<2x1x16xf32>
    %cst_3 = arith.constant 0.0333333351 : f32
    %6 = vector.broadcast %cst_3 : f32 to vector<2x1x16xf32>
    %7 = arith.mulf %2, %6 : vector<2x1x16xf32>
    %cst_4 = arith.constant 0.0333333351 : f32
    %8 = vector.broadcast %cst_4 : f32 to vector<2x1x16xf32>
    %9 = arith.mulf %5, %8 : vector<2x1x16xf32>
    %10 = arith.mulf %7, %7 : vector<2x1x16xf32>
    %11 = arith.subf %9, %10 : vector<2x1x16xf32>
    %cst_5 = arith.constant 0.000000e+00 : f32
    %12 = vector.broadcast %cst_5 : f32 to vector<2x1x16xf32>
    %13 = arith.maximumf %11, %12 : vector<2x1x16xf32>
    %cst_6 = arith.constant 9.99999974E-6 : f32
    %14 = vector.broadcast %cst_6 : f32 to vector<2x1x16xf32>
    %15 = arith.addf %13, %14 : vector<2x1x16xf32>
    %16 = math.rsqrt %15 : vector<2x1x16xf32>
    %c0_7 = arith.constant 0 : index
    %c0_8 = arith.constant 0 : index
    %17 = vector.load %arg2[%c0_7, %c0_8] : memref<30x2xf32, #tpu.memory_space<vmem>>, vector<30x1xf32>
    %c0_9 = arith.constant 0 : index
    %c1 = arith.constant 1 : index
    %18 = vector.load %arg2[%c0_9, %c1] : memref<30x2xf32, #tpu.memory_space<vmem>>, vector<30x1xf32>
    %19 = vector.broadcast %7 : vector<2x1x16xf32> to vector<2x30x16xf32>
    %20 = arith.subf %0, %19 : vector<2x30x16xf32>
    %21 = vector.broadcast %16 : vector<2x1x16xf32> to vector<2x30x16xf32>
    %22 = arith.mulf %20, %21 : vector<2x30x16xf32>
    %23 = vector.shape_cast %17 : vector<30x1xf32> to vector<1x30x1xf32>
    %24 = vector.broadcast %23 : vector<1x30x1xf32> to vector<2x30x16xf32>
    %25 = arith.mulf %22, %24 : vector<2x30x16xf32>
    %26 = vector.shape_cast %18 : vector<30x1xf32> to vector<1x30x1xf32>
    %27 = vector.broadcast %26 : vector<1x30x1xf32> to vector<2x30x16xf32>
    %28 = arith.addf %25, %27 : vector<2x30x16xf32>
    %c0_10 = arith.constant 0 : index
    %c0_11 = arith.constant 0 : index
    %c0_12 = arith.constant 0 : index
    %29 = vector.load %arg3[%c0_10, %c0_11, %c0_12] : memref<2x30x16xf32, #tpu.memory_space<vmem>>, vector<2x30x16xf32>
    tpu.vector_store %arg3[%c0_10, %c0_11, %c0_12], %28 {strides = array<i32>} : memref<2x30x16xf32, #tpu.memory_space<vmem>>, vector<2x30x16xf32>,
    return
  }
  func.func @transform_0(%arg0: i32) -> (i32, i32, i32) {
    %c0_i32 = arith.constant 0 : i32
    %c0_i32_0 = arith.constant 0 : i32
    %c0_i32_1 = arith.constant 0 : i32
    return %arg0, %c0_i32, %c0_i32_0 : i32, i32, i32
  }
  func.func @transform_1(%arg0: i32) -> (i32, i32) {
    %c0_i32 = arith.constant 0 : i32
    %c0_i32_0 = arith.constant 0 : i32
    %c0_i32_1 = arith.constant 0 : i32
    return %c0_i32, %c0_i32_0 : i32, i32
  }
  func.func @transform_2(%arg0: i32) -> (i32, i32, i32) {
    %c0_i32 = arith.constant 0 : i32
    %c0_i32_0 = arith.constant 0 : i32
    %c0_i32_1 = arith.constant 0 : i32
    return %arg0, %c0_i32, %c0_i32_0 : i32, i32, i32
  }
}

</mosaic_0001>

<llo_original>
// kernel: tpu_custom_call.1
$region0: #{tpu_custom_call.1}
  #allocation0 [shape = 'u32[]', space=smem, size = 0x4, offset = 0x4, fixed_abs, tag = 'smem constant byte address 0x4 - core index']
  #allocation1 [shape = 'u32[144,128]{1,0:T(1,128)}', space=vmem, size = 0x12000, scoped, tag = 'internal scratch']
  %s0 = inlined_call_operand.vmem [shape: f32[2,30,16], index: 0, kind: input, shape index: {}]
  %s1 = inlined_call_operand.vmem [shape: f32[30,2], index: 1, kind: input, shape index: {}]
  %s2 = inlined_call_operand.vmem [shape: f32[2,30,16], index: 2, kind: output, shape index: {}]
  %s3 = sld [smem:[#allocation0]]
  $region18: #{tpu_custom_call.1} parent=0
    _
  %s5 = ssub.s32 1, %s3
  %s6 = scalar_select 0, %s5, %s3
  // Predicated region
  $region2: #{tpu_custom_call.1} parent=0 // pred_check
    _
  $region3: #{tpu_custom_call.1} parent=0 // pred_check_branch
    %8 = sbr.rel (0) target = $region5
  $region4: #{tpu_custom_call.1} parent=0 // pred_region
    _
  $region5: #{tpu_custom_call.1} parent=0 // pred_fallthru
    _
  // Predicated region
  $region6: #{tpu_custom_call.1} parent=0 // pred_check
    _
  $region7: #{tpu_custom_call.1} parent=0 // pred_check_branch
    %10 = sbr.rel (0) target = $region9
  $region8: #{tpu_custom_call.1} parent=0 // pred_region
    _
  $region9: #{tpu_custom_call.1} parent=0 // pred_fallthru
    _
  %v11 = vld [vmem:[%s0] sm:$0xff]
  %v12 = vld [vmem:[%s0 + $0x8] sm:$0xff]
  %v13 = vld [vmem:[%s0 + $0x10] sm:$0xff]
  %v14 = vld [vmem:[%s0 + $0x18] sm:$0x3f]
  %v15 = vld [vmem:[%s0 + $0x20] sm:$0xff]
  %v16 = vld [vmem:[%s0 + $0x28] sm:$0xff]
  %v17 = vld [vmem:[%s0 + $0x30] sm:$0xff]
  %v18 = vld [vmem:[%s0 + $0x38] sm:$0x3f]
  %vm19 = vcmask 130048
  %v20 = vsel %vm19, %v11, 0.0
  %v21 = vsel %vm19, %v12, 0.0
  %v22 = vadd.f32 %v20, %v21
  %v23 = vsel %vm19, %v13, 0.0
  %v24 = vadd.f32 %v22, %v23
  %vm25 = vcmask 128000
  %v26 = vsel %vm25, %v14, 0.0
  %v27 = vadd.f32 %v24, %v26
  %v28 = vrot.slane %v27, 4
  %v29 = vadd.f32 %v27, %v28
  %v30 = vrot.slane %v29, 2
  %v31 = vadd.f32 %v29, %v30
  %v32 = vrot.slane %v31, 1
  %v33 = vadd.f32 %v31, %v32
  %v34 = vsel %vm19, %v15, 0.0
  %v35 = vsel %vm19, %v16, 0.0
  %v36 = vadd.f32 %v34, %v35
  %v37 = vsel %vm19, %v17, 0.0
  %v38 = vadd.f32 %v36, %v37
  %v39 = vsel %vm25, %v18, 0.0
  %v40 = vadd.f32 %v38, %v39
  %v41 = vrot.slane %v40, 4
  %v42 = vadd.f32 %v40, %v41
  %v43 = vrot.slane %v42, 2
  %v44 = vadd.f32 %v42, %v43
  %v45 = vrot.slane %v44, 1
  %v46 = vadd.f32 %v44, %v45
  %v47 = vmul.f32 %v11, %v11
  %v48 = vmul.f32 %v12, %v12
  %v49 = vmul.f32 %v13, %v13
  %v50 = vmul.f32 %v14, %v14
  %v51 = vmul.f32 %v15, %v15
  %v52 = vmul.f32 %v16, %v16
  %v53 = vmul.f32 %v17, %v17
  %v54 = vmul.f32 %v18, %v18
  %v55 = vsel %vm19, %v47, 0.0
  %v56 = vsel %vm19, %v48, 0.0
  %v57 = vadd.f32 %v55, %v56
  %v58 = vsel %vm19, %v49, 0.0
  %v59 = vadd.f32 %v57, %v58
  %v60 = vsel %vm25, %v50, 0.0
  %v61 = vadd.f32 %v59, %v60
  %v62 = vrot.slane %v61, 4
  %v63 = vadd.f32 %v61, %v62
  %v64 = vrot.slane %v63, 2
  %v65 = vadd.f32 %v63, %v64
  %v66 = vrot.slane %v65, 1
  %v67 = vadd.f32 %v65, %v66
  %v68 = vsel %vm19, %v51, 0.0
  %v69 = vsel %vm19, %v52, 0.0
  %v70 = vadd.f32 %v68, %v69
  %v71 = vsel %vm19, %v53, 0.0
  %v72 = vadd.f32 %v70, %v71
  %v73 = vsel %vm25, %v54, 0.0
  %v74 = vadd.f32 %v72, %v73
  %v75 = vrot.slane %v74, 4
  %v76 = vadd.f32 %v74, %v75
  %v77 = vrot.slane %v76, 2
  %v78 = vadd.f32 %v76, %v77
  %v79 = vrot.slane %v78, 1
  %v80 = vadd.f32 %v78, %v79
  %v81 = vmul.f32 %v33, 0.033333335
  %v82 = vmul.f32 %v46, 0.033333335
  %v83 = vmul.f32 %v67, 0.033333335
  %v84 = vmul.f32 %v80, 0.033333335
  %v85 = vmul.f32 %v81, %v81
  %v86 = vmul.f32 %v82, %v82
  %v87 = vsub.f32 %v83, %v85
  %v88 = vsub.f32 %v84, %v86
  %v89 = vmax.f32 %v87, 0.0
  %v90 = vmax.f32 %v88, 0.0
  %v91 = vadd.f32 %v89, 1e-05
  %v92 = vadd.f32 %v90, 1e-05
  %v93 = vrsqrt.pop %v91
  %v94 = vrsqrt.pop %v92
  %v95 = vld [vmem:[%s1] sm:$0xff]
  %v96 = vld [vmem:[%s1 + $0x8] sm:$0xff]
  %v97 = vld [vmem:[%s1 + $0x10] sm:$0xff]
  %v98 = vld [vmem:[%s1 + $0x18] sm:$0x3f]
  %v99 = vsub.f32 %v11, %v81
  %v100 = vsub.f32 %v12, %v81
  %v101 = vsub.f32 %v13, %v81
  %v102 = vsub.f32 %v14, %v81
  %v103 = vsub.f32 %v15, %v82
  %v104 = vsub.f32 %v16, %v82
  %v105 = vsub.f32 %v17, %v82
  %v106 = vsub.f32 %v18, %v82
  %v107 = vmul.f32 %v99, %v93
  %v108 = vmul.f32 %v100, %v93
  %v109 = vmul.f32 %v101, %v93
  %v110 = vmul.f32 %v102, %v93
  %v111 = vmul.f32 %v103, %v94
  %v112 = vmul.f32 %v104, %v94
  %v113 = vmul.f32 %v105, %v94
  %v114 = vmul.f32 %v106, %v94
  %116 = vset.pattern.permute.xlu0 0
  %117 = vperm.xlu0 %116, %v95
  %v118 = vpop.permute.xlu0 %117
  %121 = vset.pattern.permute.xlu0 0
  %122 = vperm.xlu0 %121, %v96
  %v123 = vpop.permute.xlu0 %122
  %126 = vset.pattern.permute.xlu0 0
  %127 = vperm.xlu0 %126, %v97
  %v128 = vpop.permute.xlu0 %127
  %131 = vset.pattern.permute.xlu0 0
  %132 = vperm.xlu0 %131, %v98
  %v133 = vpop.permute.xlu0 %132
  %v135 = vmul.f32 %v107, %v118
  %v136 = vmul.f32 %v108, %v123
  %v137 = vmul.f32 %v109, %v128
  %v138 = vmul.f32 %v110, %v133
  %v139 = vmul.f32 %v111, %v118
  %v140 = vmul.f32 %v112, %v123
  %v141 = vmul.f32 %v113, %v128
  %v142 = vmul.f32 %v114, %v133
  %143 = vset.pattern.permute.xlu0 1
  %144 = vperm.xlu0 %143, %v95
  %v145 = vpop.permute.xlu0 %144
  %147 = vset.pattern.permute.xlu0 1
  %148 = vperm.xlu0 %147, %v96
  %v149 = vpop.permute.xlu0 %148
  %151 = vset.pattern.permute.xlu0 1
  %152 = vperm.xlu0 %151, %v97
  %v153 = vpop.permute.xlu0 %152
  %155 = vset.pattern.permute.xlu0 1
  %156 = vperm.xlu0 %155, %v98
  %v157 = vpop.permute.xlu0 %156
  %v159 = vadd.f32 %v135, %v145
  %v160 = vadd.f32 %v136, %v149
  %v161 = vadd.f32 %v137, %v153
  %v162 = vadd.f32 %v138, %v157
  %v163 = vadd.f32 %v139, %v145
  %v164 = vadd.f32 %v140, %v149
  %v165 = vadd.f32 %v141, %v153
  %v166 = vadd.f32 %v142, %v157
  %167 = vst.msk [vmem:[%s2] sm:$0xff] %vm19, %v159
  %168 = vst.msk [vmem:[%s2 + $0x8] sm:$0xff] %vm19, %v160
  %169 = vst.msk [vmem:[%s2 + $0x10] sm:$0xff] %vm19, %v161
  %170 = vst.msk [vmem:[%s2 + $0x18] sm:$0x3f] %vm25, %v162
  %171 = vst.msk [vmem:[%s2 + $0x20] sm:$0xff] %vm19, %v163
  %172 = vst.msk [vmem:[%s2 + $0x28] sm:$0xff] %vm19, %v164
  %173 = vst.msk [vmem:[%s2 + $0x30] sm:$0xff] %vm19, %v165
  %174 = vst.msk [vmem:[%s2 + $0x38] sm:$0x3f] %vm25, %v166
  // Predicated region
  $region10: #{tpu_custom_call.1} parent=0 // pred_check
    _
  $region11: #{tpu_custom_call.1} parent=0 // pred_check_branch
    %176 = sbr.rel (0) target = $region13
  $region12: #{tpu_custom_call.1} parent=0 // pred_region
    _
  $region13: #{tpu_custom_call.1} parent=0 // pred_fallthru
    _
  // Predicated region
  $region14: #{tpu_custom_call.1} parent=0 // pred_check
    _
  $region15: #{tpu_custom_call.1} parent=0 // pred_check_branch
    %178 = sbr.rel (0) target = $region17
  $region16: #{tpu_custom_call.1} parent=0 // pred_region
    _
  $region17: #{tpu_custom_call.1} parent=0 // pred_fallthru
    _

</llo_original>
